<compile_context>
chip_gen: v5e
topology: v5e:2x2
jax: 0.10.0
libtpu: 0.0.40
codegen_flags: <defaults>
</compile_context>

<pallas_src>
import math

import jax
import jax.numpy as jnp
from jax.experimental import pallas as pl
from jax.experimental.pallas import tpu as pltpu

LANE = 128
MAX_LANE_TILE = 32768  # review: 8K-32K lane-wide output slabs are the big lever


def _hadamard_kernel(x_ref, w_ref, o_ref):
    # x_ref: (tile_n, tile_f), w_ref: (1, tile_f) — sublane-broadcast multiply.
    o_ref[...] = (x_ref[...] * w_ref[...]).astype(o_ref.dtype)


def _round_up(a, b):
    return (a + b - 1) // b * b


def _chip_block_budget():
    """Per-buffer block budget (bytes) and optional vmem_limit, per TPU gen."""
    try:
        kind = jax.devices()[0].device_kind.lower()
    except Exception:  # no device info -> conservative defaults
        kind = ""
    if "v7" in kind:
        # ~3.2 TB/s per TC: bigger blocks amortize the ~0.35 us/step overhead.
        return 5 * 1024 * 1024, 44 * 1024 * 1024
    if "v6" in kind:
        # 32 MiB default scoped VMEM: 3.5 MiB blocks double-buffered fit fine.
        return 3 * 1024 * 1024 + 512 * 1024, None
    # v5e (16 MiB scoped) / unknown: stay conservative.
    return 2 * 1024 * 1024, None


def _choose_tiles(N, F, itemsize, row_align, budget_bytes):
    """Pick (tile_n, tile_f) jointly from a block-byte budget."""
    F128 = _round_up(F, LANE)

    # Widest lane tile that fits the budget at the minimum (padded) row count.
    max_f_by_budget = max(LANE, (budget_bytes // (row_align * itemsize)) // LANE * LANE)
    max_f_by_budget = min(max_f_by_budget, MAX_LANE_TILE)

    if F128 <= max_f_by_budget:
        tile_f = F          # full feature extent: exact, no OOB lanes at all
    else:
        tile_f = max_f_by_budget  # multiple of 128; ragged tail is clipped

    # Rows that still fit the budget given tile_f.
    rows_budget = max(row_align, budget_bytes // (tile_f * itemsize))
    if N <= rows_budget:
        tile_n = N          # full-extent row block: no alignment requirement
    else:
        tile_n = max(row_align, (rows_budget // row_align) * row_align)
    return tile_n, tile_f


def hadamard_product(x, weights):
    """x: (N, *shape), weights: shape -> x * weights (broadcast over batch)."""
    orig_shape = x.shape
    N = orig_shape[0]
    feat_shape = tuple(orig_shape[1:])
    assert tuple(weights.shape) == feat_shape, (weights.shape, feat_shape)
    F = math.prod(feat_shape)

    out_dtype = jnp.result_type(x.dtype, weights.dtype)

    # Lane-dense flatten (metadata-only reshapes, no HBM traffic).
    x2 = x.reshape(N, F)
    w2 = weights.reshape(1, F)

    budget, vmem_limit = _chip_block_budget()
    itemsize = max(jnp.dtype(x.dtype).itemsize, jnp.dtype(out_dtype).itemsize)
    min_itemsize = min(jnp.dtype(x.dtype).itemsize,
                       jnp.dtype(weights.dtype).itemsize,
                       jnp.dtype(out_dtype).itemsize)
    # Native sublane tiling: 8 for 32-bit, 16 for 16-bit, 32 for 8-bit dtypes.
    row_align = {1: 32, 2: 16}.get(min_itemsize, 8)

    tile_n, tile_f = _choose_tiles(N, F, itemsize, row_align, budget)

    # Make sure the grid has >= 2 steps along a parallel axis whenever it is
    # cheap to do so, so v7x can feed both TensorCores.
    if pl.cdiv(F, tile_f) * pl.cdiv(N, tile_n) == 1:
        if _round_up(F, LANE) >= 2 * LANE:
            tile_f = _round_up(pl.cdiv(F, 2), LANE)
        elif N >= 2 * row_align:
            tile_n = ((N // 2) // row_align) * row_align

    # n is the fastest-varying grid axis so the weights block (indexed only by
    # f) stays resident across the whole n sweep and is not re-fetched.
    grid = (pl.cdiv(F, tile_f), pl.cdiv(N, tile_n))

    out = pl.pallas_call(
        _hadamard_kernel,
        out_shape=jax.ShapeDtypeStruct((N, F), out_dtype),
        grid=grid,
        in_specs=[
            pl.BlockSpec((tile_n, tile_f), lambda f, n: (n, f)),
            pl.BlockSpec((1, tile_f), lambda f, n: (0, f)),
        ],
        out_specs=pl.BlockSpec((tile_n, tile_f), lambda f, n: (n, f)),
        compiler_params=pltpu.CompilerParams(
            dimension_semantics=("parallel", "parallel"),
            vmem_limit_bytes=vmem_limit,
        ),
    )(x2, w2)

    return out.reshape(orig_shape)


if __name__ == "__main__":
    key = jax.random.PRNGKey(0)
    kx, kw = jax.random.split(key)

    # Shapes consistent with the module: x (N, C, H, W), weights (C, H, W).
    N, C, H, W = 2, 4, 16, 16
    x = jax.random.normal(kx, (N, C, H, W), dtype=jnp.float32)
    # matches torch.rand(shape): uniform [0, 1)
    weights = jax.random.uniform(kw, (C, H, W), dtype=jnp.float32)

    out = hadamard_product(x, weights)
    jax.block_until_ready(out)

    ref = x * weights[None, ...]
    assert out.shape == x.shape
    assert out.dtype == ref.dtype
    assert jnp.allclose(out, ref, atol=1e-6, rtol=1e-6), "mismatch vs reference"

    # Ragged-shape check: exercises the cdiv/clipped-boundary (no-pad) path.
    xr = jax.random.normal(kx, (3, 5, 7, 9), dtype=jnp.float32)
    wr = jax.random.uniform(kw, (5, 7, 9), dtype=jnp.float32)
    outr = hadamard_product(xr, wr)
    jax.block_until_ready(outr)
    assert jnp.allclose(outr, xr * wr[None, ...], atol=1e-6, rtol=1e-6), \
        "ragged-shape mismatch vs reference"

    print("KERNEL_OK")
</pallas_src>

<mosaic_0001>
module attributes {stable_mosaic.version = 11 : i64} {
  func.func @_hadamard_kernel(%arg0: i32, %arg1: i32, %arg2: memref<2x512xf32, #tpu.memory_space<vmem>>, %arg3: memref<1x512xf32, #tpu.memory_space<vmem>>, %arg4: memref<2x512xf32, #tpu.memory_space<vmem>>) attributes {dimension_semantics = [#tpu.dimension_semantics<parallel>, #tpu.dimension_semantics<parallel>], iteration_bounds = array<i64: 2, 1>, scalar_prefetch = 0 : i64, scratch_operands = 0 : i64, tpu.core_type = #tpu.core_type<tc>, window_params = [{transform_indices = @transform_0, window_bounds = array<i64: 2, 512>}, {transform_indices = @transform_1, window_bounds = array<i64: 1, 512>}, {transform_indices = @transform_2, window_bounds = array<i64: 2, 512>}]} {
    %c0 = arith.constant 0 : index
    %c0_0 = arith.constant 0 : index
    %0 = vector.load %arg2[%c0, %c0_0] : memref<2x512xf32, #tpu.memory_space<vmem>>, vector<2x512xf32>
    %c0_1 = arith.constant 0 : index
    %c0_2 = arith.constant 0 : index
    %1 = vector.load %arg3[%c0_1, %c0_2] : memref<1x512xf32, #tpu.memory_space<vmem>>, vector<1x512xf32>
    %2 = vector.broadcast %1 : vector<1x512xf32> to vector<2x512xf32>
    %3 = arith.mulf %0, %2 : vector<2x512xf32>
    %c0_3 = arith.constant 0 : index
    %c0_4 = arith.constant 0 : index
    %4 = vector.load %arg4[%c0_3, %c0_4] : memref<2x512xf32, #tpu.memory_space<vmem>>, vector<2x512xf32>
    tpu.vector_store %arg4[%c0_3, %c0_4], %3 {strides = array<i32>} : memref<2x512xf32, #tpu.memory_space<vmem>>, vector<2x512xf32>,
    return
  }
  func.func @transform_0(%arg0: i32, %arg1: i32) -> (i32, i32) {
    %c0_i32 = arith.constant 0 : i32
    return %arg1, %arg0 : i32, i32
  }
  func.func @transform_1(%arg0: i32, %arg1: i32) -> (i32, i32) {
    %c0_i32 = arith.constant 0 : i32
    %c0_i32_0 = arith.constant 0 : i32
    return %c0_i32, %arg0 : i32, i32
  }
  func.func @transform_2(%arg0: i32, %arg1: i32) -> (i32, i32) {
    %c0_i32 = arith.constant 0 : i32
    return %arg1, %arg0 : i32, i32
  }
}

</mosaic_0001>

<llo_original>
// kernel: tpu_custom_call.1
$region0: #{tpu_custom_call.1}
  #allocation0 [shape = 'u32[]', space=smem, size = 0x4, offset = 0x4, fixed_abs, tag = 'smem constant byte address 0x4 - core index']
  #allocation1 [shape = 'u32[72,128]{1,0:T(1,128)}', space=vmem, size = 0x9000, scoped, tag = 'internal scratch']
  %s0 = inlined_call_operand.hbm [shape: f32[2,1024], index: 0, kind: input, shape index: {}]
  %s1 = inlined_call_operand.hbm [shape: f32[1,1024], index: 1, kind: input, shape index: {}]
  %s2 = inlined_call_operand.hbm [shape: f32[2,1024], index: 2, kind: output, shape index: {}]
  %s3 = sld [smem:[#allocation0]]
  $region49: #{tpu_custom_call.1} parent=0
    _
  %s5 = ssub.s32 1, %s3
  %s6 = scalar_select 0, %s5, %s3
  $region1: #{tpu_custom_call.1} parent=0
    #allocation2 [shape = 'u8[8192]{0}', space=vmem, size = 0x2000, scoped, tag = 'input window, operand 0']
    #allocation3 [shape = 's32[2]{0}', space=sflag, size = 0x8, scoped, tag = 'scoped memory for tpu_custom_call.1']
    #allocation4 [shape = 's32[2]{0}', space=sflag, size = 0x8, scoped, tag = 'scoped memory for tpu_custom_call.1']
    #allocation5 [shape = 'u8[4096]{0}', space=vmem, size = 0x1000, scoped, tag = 'input window, operand 1']
    #allocation6 [shape = 's32[2]{0}', space=sflag, size = 0x8, scoped, tag = 'scoped memory for tpu_custom_call.1']
    #allocation7 [shape = 'u8[8192]{0}', space=vmem, size = 0x2000, scoped, tag = 'output window, operand 0']
    %7 = vsyncpa [#allocation3], 0
    %s8 = scalar_lea.sflag [#allocation3], 1
    %9 = vsyncpa %s8, 0
    %10 = vsyncpa [#allocation6], 0
    %s11 = scalar_lea.sflag [#allocation6], 1
    %12 = vsyncpa %s11, 0
    %13 = vsyncpa [#allocation4], 0
    %s14 = scalar_lea.sflag [#allocation4], 1
    %15 = vsyncpa %s14, 0
    loop: start=0, step=1, limit=4
    $region2: #{tpu_custom_call.1} parent=1 // loop_pre_header
      _
    $region3: #{tpu_custom_call.1} parent=1 // loop_header
      %s17 = sphi 0, %s21
      %p18 = scmp.ge.s32.totalorder %s17, 4
      %s24 = sphi 0, %s36
      %s25 = sphi 0, %s32
      %s26 = sphi 0, %s24
      %s27 = sphi 0, %s25
      %s28 = sphi 0, %s26
      %s29 = sphi 0, %s27
      %s41 = sphi 0, %s43
      %s44 = sphi 0, %s41
      %s45 = sphi 0, %s44
      %s61 = sphi 0, %s45
      %s67 = sphi 0, %s69
      %s70 = sphi 0, %s67
      %s71 = sphi 0, %s70
      %s87 = sphi 0, %s71
      %s95 = sphi 0, %s97
      %s98 = sphi 0, %s95
      %s99 = sphi 0, %s98
      %s115 = sphi 0, %s99
    $region4: #{tpu_custom_call.1} parent=1 // loop_header_branch
      %20 = sbr.rel (%p18) target = $region8
    $region5: #{tpu_custom_call.1} parent=1 // loop_body
      %s22 = ssub.s32 %s17, 1
      %s23 = ssub.s32 %s17, 2
      %s30 = sadd.s32 1, %s25
      %p31 = scmp.ge.s32.totalorder %s30, 1
      %s32 = scalar_select %p31, 0, %s30
      %s33 = sadd.s32 1, %s24
      %s34 = scalar_select %p31, %s33, %s24
      %p35 = scmp.ge.s32.totalorder %s34, 2
      %s36 = scalar_select %p35, 0, %s34
      %s37 = ssub.s32 %s25, %s32
      %s38 = ssub.s32 %s24, %s36
      %s39 = sor.u32 %s37, %s38
      %p40 = scmp.eq.s32.totalorder %s39, 0
      %s42 = sadd.s32 %s41, 1
      %s43 = scalar_select %p40, %s41, %s42
      %p46 = pneg %p40
      %p47 = scmp.eq.s32.totalorder %s17, 1
      %p48 = por %p46, %p47
      %p49 = scmp.ne.s32.totalorder %s41, %s44
      %p50 = scmp.eq.s32.totalorder %s17, 0
      %p51 = por %p49, %p50
      %p52 = scmp.ne.s32.totalorder %s41, %s44
      %p53 = scmp.eq.s32.totalorder %s22, 1
      %p54 = por %p52, %p53
      %p55 = scmp.ne.s32.totalorder %s44, %s45
      %p56 = scmp.eq.s32.totalorder %s22, 0
      %p57 = por %p55, %p56
      %p58 = scmp.ne.s32.totalorder %s44, %s45
      %p59 = scmp.eq.s32.totalorder %s23, 1
      %p60 = por %p58, %p59
      %p62 = scmp.ne.s32.totalorder %s45, %s61
      %p63 = scmp.eq.s32.totalorder %s23, 0
      %p64 = por %p62, %p63
      %s65 = ssub.s32 %s24, %s36
      %p66 = scmp.eq.s32.totalorder %s65, 0
      %s68 = sadd.s32 %s67, 1
      %s69 = scalar_select %p66, %s67, %s68
      %p72 = pneg %p66
      %p73 = scmp.eq.s32.totalorder %s17, 1
      %p74 = por %p72, %p73
      %p75 = scmp.ne.s32.totalorder %s67, %s70
      %p76 = scmp.eq.s32.totalorder %s17, 0
      %p77 = por %p75, %p76
      %p78 = scmp.ne.s32.totalorder %s67, %s70
      %p79 = scmp.eq.s32.totalorder %s22, 1
      %p80 = por %p78, %p79
      %p81 = scmp.ne.s32.totalorder %s70, %s71
      %p82 = scmp.eq.s32.totalorder %s22, 0
      %p83 = por %p81, %p82
      %p84 = scmp.ne.s32.totalorder %s70, %s71
      %p85 = scmp.eq.s32.totalorder %s23, 1
      %p86 = por %p84, %p85
      %p88 = scmp.ne.s32.totalorder %s71, %s87
      %p89 = scmp.eq.s32.totalorder %s23, 0
      %p90 = por %p88, %p89
      %s91 = ssub.s32 %s25, %s32
      %s92 = ssub.s32 %s24, %s36
      %s93 = sor.u32 %s91, %s92
      %p94 = scmp.eq.s32.totalorder %s93, 0
      %s96 = sadd.s32 %s95, 1
      %s97 = scalar_select %p94, %s95, %s96
      %p100 = pneg %p94
      %p101 = scmp.eq.s32.totalorder %s17, 1
      %p102 = por %p100, %p101
      %p103 = scmp.ne.s32.totalorder %s95, %s98
      %p104 = scmp.eq.s32.totalorder %s17, 0
      %p105 = por %p103, %p104
      %p106 = scmp.ne.s32.totalorder %s95, %s98
      %p107 = scmp.eq.s32.totalorder %s22, 1
      %p108 = por %p106, %p107
      %p109 = scmp.ne.s32.totalorder %s98, %s99
      %p110 = scmp.eq.s32.totalorder %s22, 0
      %p111 = por %p109, %p110
      %p112 = scmp.ne.s32.totalorder %s98, %s99
      %p113 = scmp.eq.s32.totalorder %s23, 1
      %p114 = por %p112, %p113
      %p116 = scmp.ne.s32.totalorder %s99, %s115
      %p117 = scmp.eq.s32.totalorder %s23, 0
      %p118 = por %p116, %p117
      %p119 = scmp.le.s32.totalorder 1, %s17
      %p120 = scmp.lt.s32.totalorder %s17, 3
      %p121 = pnand %p119, %p120
      %p122 = pneg %p121
      // Predicated region
      $region9: #{tpu_custom_call.1} parent=5 // pred_check
        _
      $region10: #{tpu_custom_call.1} parent=5 // pred_check_branch
        %124 = sbr.rel (%p121) target = $region12
      $region11: #{tpu_custom_call.1} parent=5 // pred_region
        %s125 = ssub.s32 %s17, 1
      $region12: #{tpu_custom_call.1} parent=5 // pred_fallthru
        _
      %p126 = scmp.lt.s32.totalorder %s17, 2
      // Predicated region
      $region13: #{tpu_custom_call.1} parent=5 // pred_check
        %p127 = pneg %p126
      $region14: #{tpu_custom_call.1} parent=5 // pred_check_branch
        %129 = sbr.rel (%p127) target = $region16
      $region15: #{tpu_custom_call.1} parent=5 // pred_region
        // Predicated region
        $region17: #{tpu_custom_call.1} parent=15 // pred_check
          %p130 = pneg %p51
        $region18: #{tpu_custom_call.1} parent=15 // pred_check_branch
          %132 = sbr.rel (%p130) target = $region20
        $region19: #{tpu_custom_call.1} parent=15 // pred_region
          %s133 = sand.u32 %s41, 1
          %s134 = scalar_lea.sflag [#allocation3], %s133
          %s135 = sand.u32 %s41, 1
          %s136 = smul.addr %s135, 8
          %s137 = scalar_lea.vmem [#allocation2], %s136
          %s138 = smul.u32 4, %s24
          %140 = vsyncadd %s134, 0
          %s141 = smul.addr %s25, 8
          %s142 = sadd.s32 %s138, %s141
          %s143 = smul.addr %s142, 2
          %s144 = scalar_lea.hbm %s0, %s143
          %s146 = sshll.u32 %s144, 4
          %s147 = int_to_ptr.hbm [resolvable:$true] %s146
          %s148 = sshll.u32 %s137, 4
          %s149 = int_to_ptr.vmem [resolvable:$true] %s148
          %151 = dma.hbm_to_vmem [thread:$0]  %s147, 128, %s149, %s134
        $region20: #{tpu_custom_call.1} parent=15 // pred_fallthru
          _
        // Predicated region
        $region21: #{tpu_custom_call.1} parent=15 // pred_check
          %p152 = pneg %p77
        $region22: #{tpu_custom_call.1} parent=15 // pred_check_branch
          %154 = sbr.rel (%p152) target = $region24
        $region23: #{tpu_custom_call.1} parent=15 // pred_region
          %s155 = sand.u32 %s67, 1
          %s156 = scalar_lea.sflag [#allocation6], %s155
          %s157 = sand.u32 %s67, 1
          %s158 = smul.addr %s157, 4
          %s159 = scalar_lea.vmem [#allocation5], %s158
          %s160 = smul.u32 4, %s24
          %162 = vsyncadd %s156, 0
          %s163 = scalar_lea.hbm %s1, %s160
          %s165 = sshll.u32 %s163, 4
          %s166 = int_to_ptr.hbm [resolvable:$true] %s165
          %s167 = sshll.u32 %s159, 4
          %s168 = int_to_ptr.vmem [resolvable:$true] %s167
          %170 = dma.hbm_to_vmem [thread:$0]  %s166, 64, %s168, %s156
        $region24: #{tpu_custom_call.1} parent=15 // pred_fallthru
          _
      $region16: #{tpu_custom_call.1} parent=5 // pred_fallthru
        _
      %p171 = scmp.le.s32.totalorder 1, %s17
      %p172 = scmp.lt.s32.totalorder %s17, 3
      %p173 = pnand %p171, %p172
      %p174 = pneg %p173
      // Predicated region
      $region25: #{tpu_custom_call.1} parent=5 // pred_check
        _
      $region26: #{tpu_custom_call.1} parent=5 // pred_check_branch
        %176 = sbr.rel (%p173) target = $region28
      $region27: #{tpu_custom_call.1} parent=5 // pred_region
        %s177 = ssub.s32 %s17, 1
        %s178 = sand.u32 %s44, 1
        %s179 = scalar_lea.sflag [#allocation3], %s178
        %s180 = sand.u32 %s44, 1
        %s181 = smul.addr %s180, 8
        %s182 = scalar_lea.vmem [#allocation2], %s181
        // Predicated region
        $region29: #{tpu_custom_call.1} parent=27 // pred_check
          %p183 = pneg %p57
        $region30: #{tpu_custom_call.1} parent=27 // pred_check_branch
          %185 = sbr.rel (%p183) target = $region32
        $region31: #{tpu_custom_call.1} parent=27 // pred_region
          %187 = dma.done %s179, 128
        $region32: #{tpu_custom_call.1} parent=27 // pred_fallthru
          _
        %s188 = sand.u32 %s70, 1
        %s189 = scalar_lea.sflag [#allocation6], %s188
        %s190 = sand.u32 %s70, 1
        %s191 = smul.addr %s190, 4
        %s192 = scalar_lea.vmem [#allocation5], %s191
        // Predicated region
        $region33: #{tpu_custom_call.1} parent=27 // pred_check
          %p193 = pneg %p83
        $region34: #{tpu_custom_call.1} parent=27 // pred_check_branch
          %195 = sbr.rel (%p193) target = $region36
        $region35: #{tpu_custom_call.1} parent=27 // pred_region
          %197 = dma.done %s189, 64
        $region36: #{tpu_custom_call.1} parent=27 // pred_fallthru
          _
        %s198 = sand.u32 %s44, 1
        %s199 = scalar_lea.sflag [#allocation3], %s198
        %s200 = sand.u32 %s44, 1
        %s201 = smul.addr %s200, 8
        %s202 = scalar_lea.vmem [#allocation2], %s201
        %p203 = pneg %p57
        %p204 = pneg %p54
        %s205 = sand.u32 %s70, 1
        %s206 = scalar_lea.sflag [#allocation6], %s205
        %s207 = sand.u32 %s70, 1
        %s208 = smul.addr %s207, 4
        %s209 = scalar_lea.vmem [#allocation5], %s208
        %p210 = pneg %p83
        %p211 = pneg %p80
        %p212 = pneg %p111
        %p213 = pneg %p108
        %s214 = sand.u32 %s98, 1
        %s215 = scalar_lea.sflag [#allocation4], %s214
        %s216 = sand.u32 %s98, 1
        %s217 = smul.addr %s216, 8
        %s218 = scalar_lea.vmem [#allocation7], %s217
        %s219 = smul.u32 4, %s26
        %s220 = smul.u32 4, %s26
        %s221 = smul.u32 4, %s26
        %v222 = vld [vmem:[%s182] sm:$0xff]
        %v223 = vld [vmem:[%s192] sm:$0xf]
        %v225 = vperm.slane %v223, 0
        %v226 = vperm.slane %v223, 1
        %v227 = vperm.slane %v223, 2
        %v228 = vperm.slane %v223, 3
        %v229 = vrot.slane %v226, 6
        %v230 = vrot.slane %v227, 4
        %v231 = vrot.slane %v228, 2
        %vm232 = vcmask 1041408
        %v233 = vsel %vm232, %v225, %v229
        %vm234 = vcmask 1045508
        %v235 = vsel %vm234, %v230, %v231
        %vm236 = vcmask 1043456
        %v237 = vsel %vm236, %v233, %v235
        %v239 = vmul.f32 %v222, %v237
        %240 = vst [vmem:[%s218] sm:$0xff] %v239
        %s241 = sand.u32 %s98, 1
        %s242 = scalar_lea.sflag [#allocation4], %s241
        %s243 = sand.u32 %s98, 1
        %s244 = smul.addr %s243, 8
        %s245 = scalar_lea.vmem [#allocation7], %s244
        // Predicated region
        $region37: #{tpu_custom_call.1} parent=27 // pred_check
          %p246 = pneg %p108
        $region38: #{tpu_custom_call.1} parent=27 // pred_check_branch
          %248 = sbr.rel (%p246) target = $region40
        $region39: #{tpu_custom_call.1} parent=27 // pred_region
          %s249 = smul.u32 4, %s26
          %251 = vsyncadd %s242, 0
          %s252 = smul.addr %s27, 8
          %s253 = sadd.s32 %s249, %s252
          %s254 = smul.addr %s253, 2
          %s255 = scalar_lea.hbm %s2, %s254
          %s257 = sshll.u32 %s245, 4
          %s258 = int_to_ptr.vmem [resolvable:$true] %s257
          %s259 = sshll.u32 %s255, 4
          %s260 = int_to_ptr.hbm [resolvable:$true] %s259
          %262 = dma.vmem_to_hbm [thread:$0]  %s258, 128, %s260, %s242
        $region40: #{tpu_custom_call.1} parent=27 // pred_fallthru
          _
      $region28: #{tpu_custom_call.1} parent=5 // pred_fallthru
        _
      %p263 = scmp.le.s32.totalorder 2, %s17
      // Predicated region
      $region41: #{tpu_custom_call.1} parent=5 // pred_check
        %p264 = pneg %p263
      $region42: #{tpu_custom_call.1} parent=5 // pred_check_branch
        %266 = sbr.rel (%p264) target = $region44
      $region43: #{tpu_custom_call.1} parent=5 // pred_region
        %s267 = ssub.s32 %s17, 2
        // Predicated region
        $region45: #{tpu_custom_call.1} parent=43 // pred_check
          %p268 = pneg %p114
        $region46: #{tpu_custom_call.1} parent=43 // pred_check_branch
          %270 = sbr.rel (%p268) target = $region48
        $region47: #{tpu_custom_call.1} parent=43 // pred_region
          %s271 = sand.u32 %s99, 1
          %s272 = scalar_lea.sflag [#allocation4], %s271
          %s273 = sand.u32 %s99, 1
          %s274 = smul.addr %s273, 8
          %s275 = scalar_lea.vmem [#allocation7], %s274
          %277 = dma.done %s272, 128
        $region48: #{tpu_custom_call.1} parent=43 // pred_fallthru
          _
      $region44: #{tpu_custom_call.1} parent=5 // pred_fallthru
        _
    $region6: #{tpu_custom_call.1} parent=1 // loop_footer
      %s21 = sadd.s32 1, %s17
    $region7: #{tpu_custom_call.1} parent=1 // loop_footer_branch
      %16 = sbr.rel target = $region3
    $region8: #{tpu_custom_call.1} parent=1 // loop_exit
      _
    %278 = vsyncpa [#allocation3], 1
    %s279 = scalar_lea.sflag [#allocation3], 1
    %280 = vsyncpa %s279, 1
    %281 = vsyncpa [#allocation6], 1
    %s282 = scalar_lea.sflag [#allocation6], 1
    %283 = vsyncpa %s282, 1
    %284 = vsyncpa [#allocation4], 1
    %s285 = scalar_lea.sflag [#allocation4], 1
    %286 = vsyncpa %s285, 1

</llo_original>
